<compile_context>
chip_gen: v6e
topology: v6e:2x2x1
jax: 0.10.0
libtpu: 0.0.40
codegen_flags: <defaults>
</compile_context>

<pallas_src>
import jax
import jax.numpy as jnp
from jax.experimental import pallas as pl
from jax.experimental.pallas import tpu as pltpu

NUM_CLASSES = 7   # class_to_index = {100:0, 200:1, ..., 700:6}
B = 2             # reference's (B,) x (B,2) broadcast is only valid for B == 2
F = 3             # cols 0-1: sensor values, col 2: anomaly class code


def _weighted_mse_penalty_kernel(x_ref, t_ref, w_ref, o_ref):
    """One grid step = TN problems.

    x_ref, t_ref : VMEM (6, TN) f32 -- row r = i*3 + j holds element (i, j) of problem's (2, 3)
    w_ref        : VMEM (2, TN) f32 -- per-problem pair of class weights (w0, w1)
    o_ref        : VMEM (1, TN) f32 -- per-problem scalar loss (lane-dense)
    """
    # targets.long(): truncation toward zero, done on the VPU (hidden under the DMA).
    t_trunc = t_ref[...].astype(jnp.int32).astype(jnp.float32)
    d = x_ref[...] - t_trunc
    d2 = d * d

    # Fused reduction.  Reference:
    #   mean(mean(w * fs_diff**2, dim=1)) + mean(w * third_diff**2)
    # with the literal (B,) x (B,2) broadcast: sensor column j scaled by w_j, anomaly row i
    # scaled by w_i.  Folding the 1/4 and 1/2 means into per-row factors gives, per problem:
    #   loss = w0 * (0.25*(d00^2 + d10^2) + 0.5*d02^2) + w1 * (0.25*(d01^2 + d11^2) + 0.5*d12^2)
    s0 = 0.25 * (d2[0:1, :] + d2[3:4, :]) + 0.5 * d2[2:3, :]
    s1 = 0.25 * (d2[1:2, :] + d2[4:5, :]) + 0.5 * d2[5:6, :]

    # TODO(synk): the reference's `penalty` loop uses undefined free variables (`time_series`,
    # `cycle_state`) and invalid tensor chained comparisons, so it is not well-defined;
    # penalty contributes 0 here.
    o_ref[...] = w_ref[0:1, :] * s0 + w_ref[1:2, :] * s1


def weighted_mse_loss_with_penalty_batched(inputs, targets, weights):
    """N independent loss evaluations in one pallas_call.

    inputs, targets: (N, 2, 3) f32; weights: (7,) f32.  Returns (N,) f32 losses.
    Precondition: targets[..., 2] in {100, ..., 700} (the PyTorch reference raises otherwise).
    """
    assert inputs.ndim == 3 and inputs.shape[1:] == (B, F) and targets.shape == inputs.shape
    n = inputs.shape[0]

    x = inputs.astype(jnp.float32)
    t = targets.astype(jnp.float32)

    # Per-class weight gather (7-entry table): tiny, done in the wrapper with a plain XLA gather.
    codes = t[:, :, 2].astype(jnp.int32)                              # (N, 2)
    mapped = jnp.clip(codes // 100 - 1, 0, NUM_CLASSES - 1)           # clamp: no OOB reads
    w_pair = jnp.asarray(weights, jnp.float32)[mapped]                # (N, 2)

    # Lane-major layouts: problems along the 128-wide lane axis.
    x6 = x.reshape(n, B * F).T                                        # (6, N)
    t6 = t.reshape(n, B * F).T                                        # (6, N)
    w2 = w_pair.T                                                     # (2, N)

    # Tile the lane axis: TN a multiple of 128, capped so VMEM use stays trivial everywhere
    # (v7x 64 MiB included): per step ~2 bufs * 15 rows * 4B * TN = 120*TN bytes.
    tn = min(2048, pl.cdiv(n, 128) * 128)
    n_pad = pl.cdiv(n, tn) * tn
    pad = n_pad - n
    if pad:
        x6 = jnp.pad(x6, ((0, 0), (0, pad)))
        t6 = jnp.pad(t6, ((0, 0), (0, pad)))
        w2 = jnp.pad(w2, ((0, 0), (0, pad)))

    out = pl.pallas_call(
        _weighted_mse_penalty_kernel,
        out_shape=jax.ShapeDtypeStruct((1, n_pad), jnp.float32),
        grid=(n_pad // tn,),
        in_specs=[
            pl.BlockSpec((B * F, tn), lambda i: (0, i)),
            pl.BlockSpec((B * F, tn), lambda i: (0, i)),
            pl.BlockSpec((B, tn), lambda i: (0, i)),
        ],
        out_specs=pl.BlockSpec((1, tn), lambda i: (0, i)),
        compiler_params=pltpu.CompilerParams(dimension_semantics=("parallel",)),
        cost_estimate=pl.CostEstimate(flops=22 * n_pad, transcendentals=0,
                                      bytes_accessed=4 * 15 * n_pad),
    )(x6, t6, w2)
    return out[0, :n]


def weighted_mse_loss_with_penalty(inputs, targets, weights):
    """Single loss evaluation, matching the PyTorch module's forward (B must be 2).

    Note: for production use at tiny N, the pure-JAX `_reference_loss` is cheaper than a
    pallas_call launch; we always go through the kernel here to exercise it.
    """
    assert inputs.shape == (B, F) and targets.shape == (B, F)
    return weighted_mse_loss_with_penalty_batched(inputs[None], targets[None], weights)[0]


def _reference_loss(inputs, targets, weights):
    # plain-JAX re-implementation of the (well-defined part of the) PyTorch forward
    t = targets.astype(jnp.int32)
    sw = weights[jnp.clip(t[:, 2] // 100 - 1, 0, NUM_CLASSES - 1)]
    fs_diff = inputs[:, :2] - t[:, :2].astype(jnp.float32)
    loss_sensors = jnp.mean(jnp.mean(sw * fs_diff ** 2, axis=1))
    third_diff = inputs[:, 2] - t[:, 2].astype(jnp.float32)
    loss_anomaly = jnp.mean(sw * third_diff ** 2)
    return loss_sensors + loss_anomaly


if __name__ == "__main__":
    key = jax.random.PRNGKey(0)
    k0, k1, k2 = jax.random.split(key, 3)

    # deterministic per-class weights (module's __init__ takes a (7,) weight vector)
    weights = jnp.linspace(0.5, 2.0, NUM_CLASSES, dtype=jnp.float32)

    # ---- single (2, 3) problem: exactly the module's forward ----
    sensor_targets = jnp.array([[11750.0, 2300.0],
                                [11900.0, 2450.0]], dtype=jnp.float32)
    class_codes = jnp.array([[100.0], [400.0]], dtype=jnp.float32)
    targets = jnp.concatenate([sensor_targets, class_codes], axis=1)      # (2, 3)
    inputs = targets + jax.random.normal(k0, (B, F), dtype=jnp.float32) * 5.0

    loss = weighted_mse_loss_with_penalty(inputs, targets, weights)
    jax.block_until_ready(loss)
    ref = _reference_loss(inputs, targets, weights)
    assert jnp.allclose(loss, ref, rtol=1e-5, atol=1e-4), (loss, ref)

    # ---- batched: N independent problems in one pallas_call (exercises padding path) ----
    N = 300
    codes_n = (jax.random.randint(k1, (N, B), 1, NUM_CLASSES + 1) * 100).astype(jnp.float32)
    base = jnp.stack([sensor_targets] * N)                                # (N, 2, 2)
    targets_n = jnp.concatenate([base, codes_n[:, :, None]], axis=2)      # (N, 2, 3)
    inputs_n = targets_n + jax.random.normal(k2, (N, B, F), dtype=jnp.float32) * 5.0

    losses = weighted_mse_loss_with_penalty_batched(inputs_n, targets_n, weights)
    jax.block_until_ready(losses)
    refs = jax.vmap(_reference_loss, in_axes=(0, 0, None))(inputs_n, targets_n, weights)
    assert jnp.allclose(losses, refs, rtol=1e-5, atol=1e-4), (losses, refs)

    print("KERNEL_OK")
</pallas_src>

<mosaic_0001>
module attributes {stable_mosaic.version = 11 : i64} {
  func.func @_weighted_mse_penalty_kernel(%arg0: i32, %arg1: memref<6x128xf32, #tpu.memory_space<vmem>>, %arg2: memref<6x128xf32, #tpu.memory_space<vmem>>, %arg3: memref<2x128xf32, #tpu.memory_space<vmem>>, %arg4: memref<1x128xf32, #tpu.memory_space<vmem>>) attributes {dimension_semantics = [#tpu.dimension_semantics<parallel>], iteration_bounds = array<i64: 1>, scalar_prefetch = 0 : i64, scratch_operands = 0 : i64, tpu.core_type = #tpu.core_type<tc>, window_params = [{transform_indices = @transform_0, window_bounds = array<i64: 6, 128>}, {transform_indices = @transform_1, window_bounds = array<i64: 6, 128>}, {transform_indices = @transform_2, window_bounds = array<i64: 2, 128>}, {transform_indices = @transform_3, window_bounds = array<i64: 1, 128>}]} {
    %c0 = arith.constant 0 : index
    %c0_0 = arith.constant 0 : index
    %0 = vector.load %arg2[%c0, %c0_0] : memref<6x128xf32, #tpu.memory_space<vmem>>, vector<6x128xf32>
    %1 = arith.fptosi %0 : vector<6x128xf32> to vector<6x128xi32>
    %2 = arith.sitofp %1 : vector<6x128xi32> to vector<6x128xf32>
    %c0_1 = arith.constant 0 : index
    %c0_2 = arith.constant 0 : index
    %3 = vector.load %arg1[%c0_1, %c0_2] : memref<6x128xf32, #tpu.memory_space<vmem>>, vector<6x128xf32>
    %4 = arith.subf %3, %2 : vector<6x128xf32>
    %5 = arith.mulf %4, %4 : vector<6x128xf32>
    %6 = vector.extract_strided_slice %5 {offsets = [0, 0], sizes = [1, 128], strides = [1, 1]} : vector<6x128xf32> to vector<1x128xf32>
    %7 = vector.extract_strided_slice %5 {offsets = [3, 0], sizes = [1, 128], strides = [1, 1]} : vector<6x128xf32> to vector<1x128xf32>
    %8 = arith.addf %6, %7 : vector<1x128xf32>
    %cst = arith.constant 2.500000e-01 : f32
    %9 = vector.broadcast %cst : f32 to vector<1x128xf32>
    %10 = arith.mulf %9, %8 : vector<1x128xf32>
    %11 = vector.extract_strided_slice %5 {offsets = [2, 0], sizes = [1, 128], strides = [1, 1]} : vector<6x128xf32> to vector<1x128xf32>
    %cst_3 = arith.constant 5.000000e-01 : f32
    %12 = vector.broadcast %cst_3 : f32 to vector<1x128xf32>
    %13 = arith.mulf %12, %11 : vector<1x128xf32>
    %14 = arith.addf %10, %13 : vector<1x128xf32>
    %15 = vector.extract_strided_slice %5 {offsets = [1, 0], sizes = [1, 128], strides = [1, 1]} : vector<6x128xf32> to vector<1x128xf32>
    %16 = vector.extract_strided_slice %5 {offsets = [4, 0], sizes = [1, 128], strides = [1, 1]} : vector<6x128xf32> to vector<1x128xf32>
    %17 = arith.addf %15, %16 : vector<1x128xf32>
    %cst_4 = arith.constant 2.500000e-01 : f32
    %18 = vector.broadcast %cst_4 : f32 to vector<1x128xf32>
    %19 = arith.mulf %18, %17 : vector<1x128xf32>
    %20 = vector.extract_strided_slice %5 {offsets = [5, 0], sizes = [1, 128], strides = [1, 1]} : vector<6x128xf32> to vector<1x128xf32>
    %cst_5 = arith.constant 5.000000e-01 : f32
    %21 = vector.broadcast %cst_5 : f32 to vector<1x128xf32>
    %22 = arith.mulf %21, %20 : vector<1x128xf32>
    %23 = arith.addf %19, %22 : vector<1x128xf32>
    %c0_6 = arith.constant 0 : index
    %c0_7 = arith.constant 0 : index
    %24 = vector.load %arg3[%c0_6, %c0_7] : memref<2x128xf32, #tpu.memory_space<vmem>>, vector<1x128xf32>
    %25 = arith.mulf %24, %14 : vector<1x128xf32>
    %c1 = arith.constant 1 : index
    %c0_8 = arith.constant 0 : index
    %26 = vector.load %arg3[%c1, %c0_8] : memref<2x128xf32, #tpu.memory_space<vmem>>, vector<1x128xf32>
    %27 = arith.mulf %26, %23 : vector<1x128xf32>
    %28 = arith.addf %25, %27 : vector<1x128xf32>
    %c0_9 = arith.constant 0 : index
    %c0_10 = arith.constant 0 : index
    %29 = vector.load %arg4[%c0_9, %c0_10] : memref<1x128xf32, #tpu.memory_space<vmem>>, vector<1x128xf32>
    tpu.vector_store %arg4[%c0_9, %c0_10], %28 {strides = array<i32>} : memref<1x128xf32, #tpu.memory_space<vmem>>, vector<1x128xf32>,
    return
  }
  func.func @transform_0(%arg0: i32) -> (i32, i32) {
    %c0_i32 = arith.constant 0 : i32
    %c0_i32_0 = arith.constant 0 : i32
    return %c0_i32, %arg0 : i32, i32
  }
  func.func @transform_1(%arg0: i32) -> (i32, i32) {
    %c0_i32 = arith.constant 0 : i32
    %c0_i32_0 = arith.constant 0 : i32
    return %c0_i32, %arg0 : i32, i32
  }
  func.func @transform_2(%arg0: i32) -> (i32, i32) {
    %c0_i32 = arith.constant 0 : i32
    %c0_i32_0 = arith.constant 0 : i32
    return %c0_i32, %arg0 : i32, i32
  }
  func.func @transform_3(%arg0: i32) -> (i32, i32) {
    %c0_i32 = arith.constant 0 : i32
    %c0_i32_0 = arith.constant 0 : i32
    return %c0_i32, %arg0 : i32, i32
  }
}

</mosaic_0001>

<llo_original>
// kernel: tpu_custom_call.1
$region0: #{tpu_custom_call.1}
  #allocation0 [shape = 'u32[]', space=smem, size = 0x4, offset = 0x4, fixed_abs, tag = 'smem constant byte address 0x4 - core index']
  #allocation1 [shape = 'u32[144,128]{1,0:T(1,128)}', space=vmem, size = 0x12000, scoped, tag = 'internal scratch']
  %s0 = inlined_call_operand.hbm [shape: f32[6,128], index: 0, kind: input, shape index: {}]
  %s1 = inlined_call_operand.hbm [shape: f32[6,128], index: 1, kind: input, shape index: {}]
  %s2 = inlined_call_operand.vmem [shape: f32[2,128], index: 2, kind: input, shape index: {}]
  %s3 = inlined_call_operand.hbm [shape: f32[1,128], index: 3, kind: output, shape index: {}]
  %s4 = sld [smem:[#allocation0]]
  $region30: #{tpu_custom_call.1} parent=0
    _
  %s6 = ssub.s32 1, %s4
  %s7 = scalar_select 0, %s6, %s4
  $region1: #{tpu_custom_call.1} parent=0
    #allocation2 [shape = 'u8[4096]{0}', space=vmem, size = 0x1000, scoped, tag = 'input window, operand 0, single buffered']
    #allocation3 [shape = 's32[1]{0}', space=sflag, size = 0x4, scoped, tag = 'scoped memory for tpu_custom_call.1']
    #allocation4 [shape = 's32[1]{0}', space=sflag, size = 0x4, scoped, tag = 'scoped memory for tpu_custom_call.1']
    #allocation5 [shape = 'u8[4096]{0}', space=vmem, size = 0x1000, scoped, tag = 'input window, operand 1, single buffered']
    #allocation6 [shape = 's32[1]{0}', space=sflag, size = 0x4, scoped, tag = 'scoped memory for tpu_custom_call.1']
    #allocation7 [shape = 'u8[512]{0}', space=vmem, size = 0x400, scoped, tag = 'output window, operand 0, single buffered']
    %8 = vsyncpa [#allocation3], 0
    %9 = vsyncpa [#allocation6], 0
    %10 = vsyncpa [#allocation4], 0
    // Predicated region
    $region2: #{tpu_custom_call.1} parent=1 // pred_check
      _
    $region3: #{tpu_custom_call.1} parent=1 // pred_check_branch
      %12 = sbr.rel (0) target = $region5
    $region4: #{tpu_custom_call.1} parent=1 // pred_region
      %s14 = ssub.s32 128, 128
      %15 = vsyncadd [#allocation3], %s14
      %s17 = sshll.u32 [#allocation2], 4
      %s18 = int_to_ptr.vmem [resolvable:$true] %s17
      %20 = dma.hbm_to_vmem [thread:$0]  %s0, 128, %s18, [#allocation3]
    $region5: #{tpu_custom_call.1} parent=1 // pred_fallthru
      _
    // Predicated region
    $region6: #{tpu_custom_call.1} parent=1 // pred_check
      _
    $region7: #{tpu_custom_call.1} parent=1 // pred_check_branch
      %22 = sbr.rel (0) target = $region9
    $region8: #{tpu_custom_call.1} parent=1 // pred_region
      %s24 = ssub.s32 128, 128
      %25 = vsyncadd [#allocation6], %s24
      %s27 = sshll.u32 [#allocation5], 4
      %s28 = int_to_ptr.vmem [resolvable:$true] %s27
      %30 = dma.hbm_to_vmem [thread:$0]  %s1, 128, %s28, [#allocation6]
    $region9: #{tpu_custom_call.1} parent=1 // pred_fallthru
      _
    // Predicated region
    $region10: #{tpu_custom_call.1} parent=1 // pred_check
      _
    $region11: #{tpu_custom_call.1} parent=1 // pred_check_branch
      %32 = sbr.rel (0) target = $region13
    $region12: #{tpu_custom_call.1} parent=1 // pred_region
      _
    $region13: #{tpu_custom_call.1} parent=1 // pred_fallthru
      _
    // Predicated region
    $region14: #{tpu_custom_call.1} parent=1 // pred_check
      _
    $region15: #{tpu_custom_call.1} parent=1 // pred_check_branch
      %34 = sbr.rel (0) target = $region17
    $region16: #{tpu_custom_call.1} parent=1 // pred_region
      %35 = dma.done [#allocation3], 128
    $region17: #{tpu_custom_call.1} parent=1 // pred_fallthru
      _
    // Predicated region
    $region18: #{tpu_custom_call.1} parent=1 // pred_check
      _
    $region19: #{tpu_custom_call.1} parent=1 // pred_check_branch
      %37 = sbr.rel (0) target = $region21
    $region20: #{tpu_custom_call.1} parent=1 // pred_region
      %38 = dma.done [#allocation6], 128
    $region21: #{tpu_custom_call.1} parent=1 // pred_fallthru
      _
    %v39 = vld [vmem:[#allocation5] sm:$0x3f]
    %v40 = vcvt.f32.s32.to.zero.pseudo %v39
    %v41 = vcvt.s32.f32 %v40
    %v42 = vld [vmem:[#allocation2] sm:$0x3f]
    %v43 = vsub.f32 %v42, %v41
    %v44 = vmul.f32 %v43, %v43
    %v46 = vrot.slane %v44, 3
    %v48 = vadd.f32 %v44, %v46
    %v49 = vmul.f32 %v48, 0.25
    %v50 = vmul.f32 %v44, 0.5
    %v52 = vrot.slane %v50, 2
    %v54 = vadd.f32 %v49, %v52
    %v55 = vrot.slane %v50, 4
    %v57 = vadd.f32 %v49, %v55
    %v58 = vld [vmem:[%s2] sm:$0x1]
    %v59 = vmul.f32 %v58, %v54
    %v60 = vld [vmem:[%s2 + $0x1] sm:$0x1]
    %v62 = vrot.slane %v57, 1
    %v64 = vmul.f32 %v60, %v62
    %v65 = vadd.f32 %v59, %v64
    %66 = vst [vmem:[#allocation7] sm:$0x1] %v65
    // Predicated region
    $region22: #{tpu_custom_call.1} parent=1 // pred_check
      _
    $region23: #{tpu_custom_call.1} parent=1 // pred_check_branch
      %68 = sbr.rel (0) target = $region25
    $region24: #{tpu_custom_call.1} parent=1 // pred_region
      %s70 = ssub.s32 16, 16
      %71 = vsyncadd [#allocation4], %s70
      %s73 = sshll.u32 [#allocation7], 4
      %s74 = int_to_ptr.vmem [resolvable:$true] %s73
      %76 = dma.vmem_to_hbm [thread:$0]  %s74, 16, %s3, [#allocation4]
    $region25: #{tpu_custom_call.1} parent=1 // pred_fallthru
      _
    // Predicated region
    $region26: #{tpu_custom_call.1} parent=1 // pred_check
      _
    $region27: #{tpu_custom_call.1} parent=1 // pred_check_branch
      %78 = sbr.rel (0) target = $region29
    $region28: #{tpu_custom_call.1} parent=1 // pred_region
      %79 = dma.done [#allocation4], 16
    $region29: #{tpu_custom_call.1} parent=1 // pred_fallthru
      _
    %80 = vsyncpa [#allocation3], 1
    %81 = vsyncpa [#allocation6], 1
    %82 = vsyncpa [#allocation4], 1

</llo_original>
